<compile_context>
chip_gen: v6e
topology: v6e:2x2x1
jax: 0.10.0
libtpu: 0.0.40
codegen_flags: <defaults>
</compile_context>

<pallas_src>
import jax
import jax.numpy as jnp
from jax.experimental import pallas as pl
from jax.experimental.pallas import tpu as pltpu


def _round_up(x, m):
    return (x + m - 1) // m * m


def _cdiv(a, b):
    return (a + b - 1) // b


def _hw_config():
    """Generation-aware tile defaults and VMEM budgets (best-effort device_kind sniff)."""
    kind = ""
    try:
        kind = (jax.devices()[0].device_kind or "").lower()
    except Exception:
        pass
    if "v7" in kind or "7x" in kind:
        # 64 MiB VMEM/TC, 2 TCs, ridge ~310 flops/byte -> TM=512 is already MXU-bound.
        return dict(tm=512, cores=2, vmem_budget=40 << 20, vmem_cap=56 << 20)
    if "v6" in kind:
        # 128 MiB VMEM, ridge ~680 flops/byte -> bigger token tiles pay off.
        return dict(tm=1024, cores=1, vmem_budget=80 << 20, vmem_cap=100 << 20)
    if "v5" in kind or "v4" in kind:
        return dict(tm=512, cores=1, vmem_budget=80 << 20, vmem_cap=100 << 20)
    # Unknown hardware: conservative (v7x-like) budgets.
    return dict(tm=512, cores=2, vmem_budget=40 << 20, vmem_cap=56 << 20)


def _vmem_need_bytes(tm, dp, hc, op, cbytes, x_bytes, out_bytes):
    """Everything resident in VMEM per pipeline stage, including kernel intermediates."""
    return int(
        2 * tm * dp * x_bytes          # x token tile (double-buffered)
        + 2 * tm * op * out_bytes      # output tile (double-buffered)
        + 2 * (dp + op) * hc * cbytes  # w1 / w2 chunks (double-buffered)
        + tm * op * 4                  # f32 accumulator scratch
        + tm * dp * cbytes             # in-kernel x cast
        + 2 * tm * hc * 4              # fc1 intermediate h and relu(h)^2 (f32)
        + 2 * op * 4                   # StarReLU bias-column term
    )


def _choose_tiles(m, dp, hp, op, cbytes, x_bytes, out_bytes, hw):
    budget = hw["vmem_budget"]
    tm = min(hw["tm"], _round_up(max(m, 1), 8))
    if hw["cores"] > 1:
        # Keep the "parallel" token axis splittable/balanced across TensorCores (v7x).
        tm = min(tm, max(8, _round_up(_cdiv(m, hw["cores"]), 8)))

    def fits(tm_, hc_):
        return _vmem_need_bytes(tm_, dp, hc_, op, cbytes, x_bytes, out_bytes) <= budget

    # Preferred: weight-resident schedule (single hidden step) -> w1/w2 block indices
    # are constant, so Pallas DMAs the weights exactly once for the whole kernel.
    if fits(tm, hp):
        return tm, hp
    # Otherwise stream the hidden dim in the largest 128-multiple chunk dividing Hp.
    q = hp // 128
    for d in sorted((d for d in range(1, q + 1) if q % d == 0), reverse=True):
        hc = 128 * d
        if hc < hp and fits(tm, hc):
            return tm, hc
    # Last resort: shrink the token tile.
    hc = 128
    while tm > 8 and not fits(tm, hc):
        tm = max(8, tm // 2)
    return tm, hc


def mlp_kernel(x_ref, w1_ref, w2_ref, scale_ref, bcol_ref, o_ref, acc_ref):
    """One (token-tile i, hidden-chunk j) step of the fused MLP."""
    j = pl.program_id(1)

    @pl.when(j == 0)
    def _init():
        acc_ref[...] = jnp.zeros_like(acc_ref)

    # Cast x in VMEM (cheaper than a wrapper-side pad/cast pass over HBM).
    x = x_ref[...].astype(w1_ref.dtype)

    # fc1 for this hidden chunk: (TM, Dp) @ (Dp, HC) -> f32 on the MXU.
    h = jnp.dot(x, w1_ref[...], preferred_element_type=jnp.float32)
    r = jnp.maximum(h, 0.0)

    # fc2 partial product of relu(h)^2 only; StarReLU scale/bias applied at finalize.
    acc_ref[...] += jnp.dot((r * r).astype(w2_ref.dtype), w2_ref[...],
                            preferred_element_type=jnp.float32)

    @pl.when(j == pl.num_programs(1) - 1)
    def _finalize():
        s = scale_ref[0, 0]
        o_ref[...] = (s * acc_ref[...] + bcol_ref[...]).astype(o_ref.dtype)


def prepare_mlp_params(w1, w2, scale, bias, *, compute_dtype=jnp.bfloat16):
    """One-time parameter prep (do NOT call per forward pass).

    w1: (D, H), w2: (H, O) stored as (in_features, out_features), i.e. torch weight.T.
    Pads/casts weights to TPU-friendly shapes once and precomputes b * colsum(W2).
    """
    D, H = w1.shape
    H2, O = w2.shape
    assert H2 == H, "w1/w2 hidden dims disagree"
    Dp, Hp, Op = _round_up(D, 128), _round_up(H, 128), _round_up(O, 128)

    w1p = jnp.zeros((Dp, Hp), compute_dtype).at[:D, :H].set(w1.astype(compute_dtype))
    w2p = jnp.zeros((Hp, Op), compute_dtype).at[:H, :O].set(w2.astype(compute_dtype))
    scale = jnp.asarray(scale, jnp.float32).reshape(1, 1)
    bias = jnp.asarray(bias, jnp.float32).reshape(())
    # StarReLU bias folded through fc2:  (s*r^2 + b) @ W2 = s*(r^2 @ W2) + b*colsum(W2).
    bcol = jnp.zeros((1, Op), jnp.float32).at[:, :O].set(
        (bias * jnp.sum(w2.astype(jnp.float32), axis=0))[None, :])

    return dict(w1=w1p, w2=w2p, scale=scale, bcol=bcol,
                D=D, H=H, O=O, Dp=Dp, Hp=Hp, Op=Op,
                compute_dtype=jnp.dtype(compute_dtype))


def mlp_forward(x2d, params, *, hw=None):
    """x2d: (M, D) -> (M, O), with params from prepare_mlp_params."""
    M, D = x2d.shape
    assert D == params["D"], "input feature dim mismatch"
    Dp, Hp, Op, O = params["Dp"], params["Hp"], params["Op"], params["O"]
    cdt = params["compute_dtype"]
    cbytes = cdt.itemsize
    out_dtype = x2d.dtype
    out_bytes = jnp.dtype(out_dtype).itemsize

    # Pad x along D only when strictly needed (D not a multiple of 128); otherwise pass
    # it through untouched and let the kernel cast (no wrapper-side HBM round trip).
    if Dp != D:
        xin = jnp.zeros((M, Dp), cdt).at[:, :D].set(x2d.astype(cdt))
    else:
        xin = x2d
    x_bytes = jnp.dtype(xin.dtype).itemsize

    hw = hw or _hw_config()
    TM, HC = _choose_tiles(M, Dp, Hp, Op, cbytes, x_bytes, out_bytes, hw)
    grid = (_cdiv(M, TM), Hp // HC)

    need = _vmem_need_bytes(TM, Dp, HC, Op, cbytes, x_bytes, out_bytes)
    vmem_limit = int(min(hw["vmem_cap"], max(16 << 20, int(1.25 * need))))

    # Weights are streamed grid[0] times when the hidden axis is chunked, once otherwise.
    weight_passes = grid[0] if grid[1] > 1 else 1
    cost = pl.CostEstimate(
        flops=2 * M * (Dp * Hp + Hp * Op),
        transcendentals=0,
        bytes_accessed=int(M * Dp * x_bytes
                           + weight_passes * (Dp * Hp + Hp * Op) * cbytes
                           + Op * 4
                           + M * Op * out_bytes),
    )

    out = pl.pallas_call(
        mlp_kernel,
        out_shape=jax.ShapeDtypeStruct((M, Op), out_dtype),
        grid_spec=pltpu.PrefetchScalarGridSpec(
            num_scalar_prefetch=0,
            grid=grid,
            in_specs=[
                pl.BlockSpec((TM, Dp), lambda i, j: (i, 0)),        # x token tile
                pl.BlockSpec((Dp, HC), lambda i, j: (0, j)),        # fc1 weight chunk
                pl.BlockSpec((HC, Op), lambda i, j: (j, 0)),        # fc2 weight chunk
                pl.BlockSpec(memory_space=pltpu.MemorySpace.SMEM),  # StarReLU scale
                pl.BlockSpec((1, Op), lambda i, j: (0, 0)),         # b * colsum(W2)
            ],
            out_specs=pl.BlockSpec((TM, Op), lambda i, j: (i, 0)),
            scratch_shapes=[pltpu.VMEM((TM, Op), jnp.float32)],
        ),
        compiler_params=pltpu.CompilerParams(
            dimension_semantics=("parallel", "arbitrary"),
            vmem_limit_bytes=vmem_limit,
        ),
        cost_estimate=cost,
    )(xin, params["w1"], params["w2"], params["scale"], params["bcol"])

    return out if Op == O else out[:, :O]


def mlp_apply(x, params):
    """x: (..., dim) -> (..., out_features), matching nn.Linear semantics."""
    lead = x.shape[:-1]
    y2d = mlp_forward(x.reshape(-1, x.shape[-1]), params)
    return y2d.reshape(*lead, params["O"])


if __name__ == "__main__":
    # Module config (small): dim=32, mlp_ratio=4 -> hidden=128, out=dim=32, bias=False.
    batch, seq, dim = 2, 8, 32
    mlp_ratio = 4
    hidden = int(mlp_ratio * dim)
    out_features = dim

    key = jax.random.PRNGKey(0)
    kx, k1, k2 = jax.random.split(key, 3)

    x = jax.random.normal(kx, (batch, seq, dim), dtype=jnp.float32)
    # Deterministic parameter init; stored pre-transposed (in, out) vs torch (out, in).
    w1 = jax.random.uniform(k1, (dim, hidden), dtype=jnp.float32,
                            minval=-1.0, maxval=1.0) / jnp.sqrt(float(dim))
    w2 = jax.random.uniform(k2, (hidden, out_features), dtype=jnp.float32,
                            minval=-1.0, maxval=1.0) / jnp.sqrt(float(hidden))

    def reference(xx, s, b):
        h = xx.reshape(-1, dim) @ w1
        a = s * jnp.maximum(h, 0.0) ** 2 + b
        return (a @ w2).reshape(batch, seq, out_features)

    # Module defaults: StarReLU scale=1.0, bias=0.0; dropout p=0.0 is identity.
    s0, b0 = jnp.float32(1.0), jnp.float32(0.0)
    y_ref = reference(x, s0, b0)

    # f32-operand path: tight check.
    p32 = prepare_mlp_params(w1, w2, s0, b0, compute_dtype=jnp.float32)
    y32 = jax.block_until_ready(mlp_apply(x, p32))
    assert y32.shape == (batch, seq, out_features)
    assert jnp.allclose(y32, y_ref, atol=1e-4, rtol=1e-4)

    # bf16-operand path (MXU-friendly, f32 accumulation): loose check.
    pbf = prepare_mlp_params(w1, w2, s0, b0, compute_dtype=jnp.bfloat16)
    ybf = jax.block_until_ready(mlp_apply(x, pbf))
    assert ybf.shape == (batch, seq, out_features)
    assert jnp.allclose(ybf, y_ref, atol=5e-2, rtol=5e-2)

    # Non-default learnable StarReLU scale/bias exercise the folded bias-column path.
    s1, b1 = jnp.float32(0.8944), jnp.float32(-0.4472)
    y_ref2 = reference(x, s1, b1)
    p32b = prepare_mlp_params(w1, w2, s1, b1, compute_dtype=jnp.float32)
    y32b = jax.block_until_ready(mlp_apply(x, p32b))
    assert jnp.allclose(y32b, y_ref2, atol=1e-3, rtol=1e-3)

    print("KERNEL_OK")
</pallas_src>

<mosaic_0001>
module attributes {stable_mosaic.version = 11 : i64} {
  func.func @mlp_kernel(%arg0: i32, %arg1: i32, %arg2: memref<8x128xf32, #tpu.memory_space<vmem>>, %arg3: memref<128x128xf32, #tpu.memory_space<vmem>>, %arg4: memref<128x128xf32, #tpu.memory_space<vmem>>, %arg5: memref<1x1xf32, #tpu.memory_space<smem>>, %arg6: memref<1x128xf32, #tpu.memory_space<vmem>>, %arg7: memref<8x128xf32, #tpu.memory_space<vmem>>, %arg8: memref<8x128xf32, #tpu.memory_space<vmem>>) attributes {dimension_semantics = [#tpu.dimension_semantics<parallel>, #tpu.dimension_semantics<arbitrary>], iteration_bounds = array<i64: 2, 1>, scalar_prefetch = 0 : i64, scratch_operands = 1 : i64, tpu.core_type = #tpu.core_type<tc>, window_params = [{transform_indices = @transform_0, window_bounds = array<i64: 8, 128>}, {transform_indices = @transform_1, window_bounds = array<i64: 128, 128>}, {transform_indices = @transform_2, window_bounds = array<i64: 128, 128>}, {transform_indices = @transform_3, window_bounds = array<i64: 1, 1>}, {pipeline_mode = #tpu.pipeline_mode<synchronous>, transform_indices = @transform_4, window_bounds = array<i64: 1, 128>}, {transform_indices = @transform_5, window_bounds = array<i64: 8, 128>}]} {
    %c0_i32 = arith.constant 0 : i32
    %0 = arith.cmpi eq, %arg1, %c0_i32 : i32
    %1 = arith.extui %0 : i1 to i32
    %c0_i32_0 = arith.constant 0 : i32
    %2 = arith.cmpi ne, %1, %c0_i32_0 : i32
    scf.if %2 {
      %cst_14 = arith.constant 0.000000e+00 : f32
      %17 = vector.broadcast %cst_14 : f32 to vector<8x128xf32>
      %c0_15 = arith.constant 0 : index
      %c0_16 = arith.constant 0 : index
      %18 = vector.load %arg8[%c0_15, %c0_16] : memref<8x128xf32, #tpu.memory_space<vmem>>, vector<8x128xf32>
      tpu.vector_store %arg8[%c0_15, %c0_16], %17 {strides = array<i32>} : memref<8x128xf32, #tpu.memory_space<vmem>>, vector<8x128xf32>,
    } else {
    }
    %c0 = arith.constant 0 : index
    %c0_1 = arith.constant 0 : index
    %3 = vector.load %arg2[%c0, %c0_1] : memref<8x128xf32, #tpu.memory_space<vmem>>, vector<8x128xf32>
    %c0_2 = arith.constant 0 : index
    %c0_3 = arith.constant 0 : index
    %4 = vector.load %arg3[%c0_2, %c0_3] : memref<128x128xf32, #tpu.memory_space<vmem>>, vector<128x128xf32>
    %cst = arith.constant dense<0.000000e+00> : vector<8x128xf32>
    %5 = tpu.matmul %3, %4, %cst {dimension_numbers = #tpu.dot_dimension_numbers<[1], [0], [0], [1], [0, 0, 1, 1], [], []>} : vector<8x128xf32>, vector<128x128xf32>, vector<8x128xf32> -> vector<8x128xf32>
    %cst_4 = arith.constant 0.000000e+00 : f32
    %6 = vector.broadcast %cst_4 : f32 to vector<8x128xf32>
    %7 = arith.maximumf %5, %6 : vector<8x128xf32>
    %c0_5 = arith.constant 0 : index
    %c0_6 = arith.constant 0 : index
    %8 = vector.load %arg8[%c0_5, %c0_6] : memref<8x128xf32, #tpu.memory_space<vmem>>, vector<8x128xf32>
    %9 = arith.mulf %7, %7 : vector<8x128xf32>
    %c0_7 = arith.constant 0 : index
    %c0_8 = arith.constant 0 : index
    %10 = vector.load %arg4[%c0_7, %c0_8] : memref<128x128xf32, #tpu.memory_space<vmem>>, vector<128x128xf32>
    %cst_9 = arith.constant dense<0.000000e+00> : vector<8x128xf32>
    %11 = tpu.matmul %9, %10, %cst_9 {dimension_numbers = #tpu.dot_dimension_numbers<[1], [0], [0], [1], [0, 0, 1, 1], [], []>} : vector<8x128xf32>, vector<128x128xf32>, vector<8x128xf32> -> vector<8x128xf32>
    %12 = arith.addf %8, %11 : vector<8x128xf32>
    %c0_10 = arith.constant 0 : index
    %c0_11 = arith.constant 0 : index
    %13 = vector.load %arg8[%c0_10, %c0_11] : memref<8x128xf32, #tpu.memory_space<vmem>>, vector<8x128xf32>
    tpu.vector_store %arg8[%c0_10, %c0_11], %12 {strides = array<i32>} : memref<8x128xf32, #tpu.memory_space<vmem>>, vector<8x128xf32>,
    %c0_i32_12 = arith.constant 0 : i32
    %14 = arith.cmpi eq, %arg1, %c0_i32_12 : i32
    %15 = arith.extui %14 : i1 to i32
    %c0_i32_13 = arith.constant 0 : i32
    %16 = arith.cmpi ne, %15, %c0_i32_13 : i32
    scf.if %16 {
      %c0_14 = arith.constant 0 : index
      %c0_15 = arith.constant 0 : index
      %17 = memref.load %arg5[%c0_14, %c0_15] : memref<1x1xf32, #tpu.memory_space<smem>>
      %c0_16 = arith.constant 0 : index
      %c0_17 = arith.constant 0 : index
      %18 = vector.load %arg8[%c0_16, %c0_17] : memref<8x128xf32, #tpu.memory_space<vmem>>, vector<8x128xf32>
      %19 = vector.broadcast %17 : f32 to vector<8x128xf32>
      %20 = arith.mulf %19, %18 : vector<8x128xf32>
      %c0_18 = arith.constant 0 : index
      %c0_19 = arith.constant 0 : index
      %21 = vector.load %arg6[%c0_18, %c0_19] : memref<1x128xf32, #tpu.memory_space<vmem>>, vector<1x128xf32>
      %22 = vector.broadcast %21 : vector<1x128xf32> to vector<8x128xf32>
      %23 = arith.addf %20, %22 : vector<8x128xf32>
      %c0_20 = arith.constant 0 : index
      %c0_21 = arith.constant 0 : index
      %24 = vector.load %arg7[%c0_20, %c0_21] : memref<8x128xf32, #tpu.memory_space<vmem>>, vector<8x128xf32>
      tpu.vector_store %arg7[%c0_20, %c0_21], %23 {strides = array<i32>} : memref<8x128xf32, #tpu.memory_space<vmem>>, vector<8x128xf32>,
    } else {
    }
    return
  }
  func.func @transform_0(%arg0: i32, %arg1: i32) -> (i32, i32) {
    %c0_i32 = arith.constant 0 : i32
    %c0_i32_0 = arith.constant 0 : i32
    return %arg0, %c0_i32 : i32, i32
  }
  func.func @transform_1(%arg0: i32, %arg1: i32) -> (i32, i32) {
    %c0_i32 = arith.constant 0 : i32
    %c0_i32_0 = arith.constant 0 : i32
    return %c0_i32, %arg1 : i32, i32
  }
  func.func @transform_2(%arg0: i32, %arg1: i32) -> (i32, i32) {
    %c0_i32 = arith.constant 0 : i32
    %c0_i32_0 = arith.constant 0 : i32
    return %arg1, %c0_i32 : i32, i32
  }
  func.func @transform_3(%arg0: i32, %arg1: i32) -> (i32, i32) {
    %c0_i32 = arith.constant 0 : i32
    %c0_i32_0 = arith.constant 0 : i32
    %c0_i32_1 = arith.constant 0 : i32
    return %c0_i32, %c0_i32_0 : i32, i32
  }
  func.func @transform_4(%arg0: i32, %arg1: i32) -> (i32, i32) {
    %c0_i32 = arith.constant 0 : i32
    %c0_i32_0 = arith.constant 0 : i32
    %c0_i32_1 = arith.constant 0 : i32
    return %c0_i32, %c0_i32_0 : i32, i32
  }
  func.func @transform_5(%arg0: i32, %arg1: i32) -> (i32, i32) {
    %c0_i32 = arith.constant 0 : i32
    %c0_i32_0 = arith.constant 0 : i32
    return %arg0, %c0_i32 : i32, i32
  }
}

</mosaic_0001>

<llo_original>
// kernel: tpu_custom_call.1
$region0: #{tpu_custom_call.1}
  #allocation0 [shape = 'u32[]', space=smem, size = 0x4, offset = 0x4, fixed_abs, tag = 'smem constant byte address 0x4 - core index']
  #allocation1 [shape = 'u32[144,128]{1,0:T(1,128)}', space=vmem, size = 0x12000, scoped, tag = 'internal scratch']
  #allocation2 [shape = 'f32[8,128]{1,0:T(8,128)}', space=vmem, size = 0x1000, scoped, tag = 'scratch operand']
  #allocation3 [shape = 'f32[1,1]{1,0:T(1,128)S(6)}', space=smem, size = 0x200, scoped, tag = 'scoped memory for tpu_custom_call.1']
  %s0 = inlined_call_operand.hbm [shape: f32[16,128], index: 0, kind: input, shape index: {}]
  %s1 = inlined_call_operand.hbm [shape: f32[128,128], index: 1, kind: input, shape index: {}]
  %s2 = inlined_call_operand.hbm [shape: f32[128,128], index: 2, kind: input, shape index: {}]
  %s3 = inlined_call_operand.<no memory space> [shape: f32[1,1], index: 3, kind: input, shape index: {}]
  %s4 = inlined_call_operand.vmem [shape: f32[1,128], index: 4, kind: input, shape index: {}]
  %s5 = inlined_call_operand.hbm [shape: f32[16,128], index: 5, kind: output, shape index: {}]
  %s6 = sld [smem:[#allocation0]]
  $region73: #{tpu_custom_call.1} parent=0
    _
  %s8 = ssub.s32 1, %s6
  %s9 = scalar_select 0, %s8, %s6
  %10 = sst [smem:[#allocation3]] %s3
  $region1: #{tpu_custom_call.1} parent=0
    #allocation4 [shape = 'u8[8192]{0}', space=vmem, size = 0x2000, scoped, tag = 'input window, operand 0']
    #allocation5 [shape = 's32[2]{0}', space=sflag, size = 0x8, scoped, tag = 'scoped memory for tpu_custom_call.1']
    #allocation6 [shape = 's32[2]{0}', space=sflag, size = 0x8, scoped, tag = 'scoped memory for tpu_custom_call.1']
    #allocation7 [shape = 'u8[65536]{0}', space=vmem, size = 0x10000, scoped, tag = 'input window, operand 1, single buffered']
    #allocation8 [shape = 's32[1]{0}', space=sflag, size = 0x4, scoped, tag = 'scoped memory for tpu_custom_call.1']
    #allocation9 [shape = 'u8[65536]{0}', space=vmem, size = 0x10000, scoped, tag = 'input window, operand 2, single buffered']
    #allocation10 [shape = 'u8[8192]{0}', space=vmem, size = 0x2000, scoped, tag = 'output window, operand 0']
    %11 = vsyncpa [#allocation5], 0
    %s12 = scalar_lea.sflag [#allocation5], 1
    %13 = vsyncpa %s12, 0
    %14 = vsyncpa [#allocation8], 0
    %15 = vsyncpa [#allocation6], 0
    %s16 = scalar_lea.sflag [#allocation6], 1
    %17 = vsyncpa %s16, 0
    loop: start=0, step=1, limit=4
    $region2: #{tpu_custom_call.1} parent=1 // loop_pre_header
      _
    $region3: #{tpu_custom_call.1} parent=1 // loop_header
      %s19 = sphi 0, %s23
      %p20 = scmp.ge.s32.totalorder %s19, 4
      %s26 = sphi 0, %s38
      %s27 = sphi 0, %s34
      %s28 = sphi 0, %s26
      %s29 = sphi 0, %s27
      %s30 = sphi 0, %s28
      %s31 = sphi 0, %s29
      %s41 = sphi 0, %s43
      %s44 = sphi 0, %s41
      %s45 = sphi 0, %s44
      %s61 = sphi 0, %s45
      %s67 = sphi 0, %s69
      %s70 = sphi 0, %s67
      %s71 = sphi 0, %s70
      %s87 = sphi 0, %s71
      %s93 = sphi 0, %s95
      %s96 = sphi 0, %s93
      %s97 = sphi 0, %s96
      %s113 = sphi 0, %s97
      %s117 = sphi 0, %s117
      %s119 = sphi 0, %s117
      %s120 = sphi 0, %s119
      %s134 = sphi 0, %s120
      %s138 = sphi 0, %s138
      %s140 = sphi 0, %s138
      %s141 = sphi 0, %s140
      %s155 = sphi 0, %s141
      %s161 = sphi 0, %s163
      %s164 = sphi 0, %s161
      %s165 = sphi 0, %s164
      %s181 = sphi 0, %s165
    $region4: #{tpu_custom_call.1} parent=1 // loop_header_branch
      %22 = sbr.rel (%p20) target = $region8
    $region5: #{tpu_custom_call.1} parent=1 // loop_body
      %s24 = ssub.s32 %s19, 1
      %s25 = ssub.s32 %s19, 2
      %s32 = sadd.s32 1, %s27
      %p33 = scmp.ge.s32.totalorder %s32, 1
      %s34 = scalar_select %p33, 0, %s32
      %s35 = sadd.s32 1, %s26
      %s36 = scalar_select %p33, %s35, %s26
      %p37 = scmp.ge.s32.totalorder %s36, 2
      %s38 = scalar_select %p37, 0, %s36
      %s39 = ssub.s32 %s26, %s38
      %p40 = scmp.eq.s32.totalorder %s39, 0
      %s42 = sadd.s32 %s41, 1
      %s43 = scalar_select %p40, %s41, %s42
      %p46 = pneg %p40
      %p47 = scmp.eq.s32.totalorder %s19, 1
      %p48 = por %p46, %p47
      %p49 = scmp.ne.s32.totalorder %s41, %s44
      %p50 = scmp.eq.s32.totalorder %s19, 0
      %p51 = por %p49, %p50
      %p52 = scmp.ne.s32.totalorder %s41, %s44
      %p53 = scmp.eq.s32.totalorder %s24, 1
      %p54 = por %p52, %p53
      %p55 = scmp.ne.s32.totalorder %s44, %s45
      %p56 = scmp.eq.s32.totalorder %s24, 0
      %p57 = por %p55, %p56
      %p58 = scmp.ne.s32.totalorder %s44, %s45
      %p59 = scmp.eq.s32.totalorder %s25, 1
      %p60 = por %p58, %p59
      %p62 = scmp.ne.s32.totalorder %s45, %s61
      %p63 = scmp.eq.s32.totalorder %s25, 0
      %p64 = por %p62, %p63
      %s65 = ssub.s32 %s27, %s34
      %p66 = scmp.eq.s32.totalorder %s65, 0
      %s68 = sadd.s32 %s67, 1
      %s69 = scalar_select %p66, %s67, %s68
      %p72 = pneg %p66
      %p73 = scmp.eq.s32.totalorder %s19, 1
      %p74 = por %p72, %p73
      %p75 = scmp.ne.s32.totalorder %s67, %s70
      %p76 = scmp.eq.s32.totalorder %s19, 0
      %p77 = por %p75, %p76
      %p78 = scmp.ne.s32.totalorder %s67, %s70
      %p79 = scmp.eq.s32.totalorder %s24, 1
      %p80 = por %p78, %p79
      %p81 = scmp.ne.s32.totalorder %s70, %s71
      %p82 = scmp.eq.s32.totalorder %s24, 0
      %p83 = por %p81, %p82
      %p84 = scmp.ne.s32.totalorder %s70, %s71
      %p85 = scmp.eq.s32.totalorder %s25, 1
      %p86 = por %p84, %p85
      %p88 = scmp.ne.s32.totalorder %s71, %s87
      %p89 = scmp.eq.s32.totalorder %s25, 0
      %p90 = por %p88, %p89
      %s91 = ssub.s32 %s27, %s34
      %p92 = scmp.eq.s32.totalorder %s91, 0
      %s94 = sadd.s32 %s93, 1
      %s95 = scalar_select %p92, %s93, %s94
      %p98 = pneg %p92
      %p99 = scmp.eq.s32.totalorder %s19, 1
      %p100 = por %p98, %p99
      %p101 = scmp.ne.s32.totalorder %s93, %s96
      %p102 = scmp.eq.s32.totalorder %s19, 0
      %p103 = por %p101, %p102
      %p104 = scmp.ne.s32.totalorder %s93, %s96
      %p105 = scmp.eq.s32.totalorder %s24, 1
      %p106 = por %p104, %p105
      %p107 = scmp.ne.s32.totalorder %s96, %s97
      %p108 = scmp.eq.s32.totalorder %s24, 0
      %p109 = por %p107, %p108
      %p110 = scmp.ne.s32.totalorder %s96, %s97
      %p111 = scmp.eq.s32.totalorder %s25, 1
      %p112 = por %p110, %p111
      %p114 = scmp.ne.s32.totalorder %s97, %s113
      %p115 = scmp.eq.s32.totalorder %s25, 0
      %p116 = por %p114, %p115
      %s118 = sadd.s32 %s117, 1
      %p121 = scmp.eq.s32.totalorder %s19, 1
      %p122 = scmp.ne.s32.totalorder %s117, %s119
      %p123 = scmp.eq.s32.totalorder %s19, 0
      %p124 = por %p122, %p123
      %p125 = scmp.ne.s32.totalorder %s117, %s119
      %p126 = scmp.eq.s32.totalorder %s24, 1
      %p127 = por %p125, %p126
      %p128 = scmp.ne.s32.totalorder %s119, %s120
      %p129 = scmp.eq.s32.totalorder %s24, 0
      %p130 = por %p128, %p129
      %p131 = scmp.ne.s32.totalorder %s119, %s120
      %p132 = scmp.eq.s32.totalorder %s25, 1
      %p133 = por %p131, %p132
      %p135 = scmp.ne.s32.totalorder %s120, %s134
      %p136 = scmp.eq.s32.totalorder %s25, 0
      %p137 = por %p135, %p136
      %s139 = sadd.s32 %s138, 1
      %p142 = scmp.eq.s32.totalorder %s19, 1
      %p143 = scmp.ne.s32.totalorder %s138, %s140
      %p144 = scmp.eq.s32.totalorder %s19, 0
      %p145 = por %p143, %p144
      %p146 = scmp.ne.s32.totalorder %s138, %s140
      %p147 = scmp.eq.s32.totalorder %s24, 1
      %p148 = por %p146, %p147
      %p149 = scmp.ne.s32.totalorder %s140, %s141
      %p150 = scmp.eq.s32.totalorder %s24, 0
      %p151 = por %p149, %p150
      %p152 = scmp.ne.s32.totalorder %s140, %s141
      %p153 = scmp.eq.s32.totalorder %s25, 1
      %p154 = por %p152, %p153
      %p156 = scmp.ne.s32.totalorder %s141, %s155
      %p157 = scmp.eq.s32.totalorder %s25, 0
      %p158 = por %p156, %p157
      %s159 = ssub.s32 %s26, %s38
      %p160 = scmp.eq.s32.totalorder %s159, 0
      %s162 = sadd.s32 %s161, 1
      %s163 = scalar_select %p160, %s161, %s162
      %p166 = pneg %p160
      %p167 = scmp.eq.s32.totalorder %s19, 1
      %p168 = por %p166, %p167
      %p169 = scmp.ne.s32.totalorder %s161, %s164
      %p170 = scmp.eq.s32.totalorder %s19, 0
      %p171 = por %p169, %p170
      %p172 = scmp.ne.s32.totalorder %s161, %s164
      %p173 = scmp.eq.s32.totalorder %s24, 1
      %p174 = por %p172, %p173
      %p175 = scmp.ne.s32.totalorder %s164, %s165
      %p176 = scmp.eq.s32.totalorder %s24, 0
      %p177 = por %p175, %p176
      %p178 = scmp.ne.s32.totalorder %s164, %s165
      %p179 = scmp.eq.s32.totalorder %s25, 1
      %p180 = por %p178, %p179
      %p182 = scmp.ne.s32.totalorder %s165, %s181
      %p183 = scmp.eq.s32.totalorder %s25, 0
      %p184 = por %p182, %p183
      %p185 = scmp.le.s32.totalorder 1, %s19
      %p186 = scmp.lt.s32.totalorder %s19, 3
      %p187 = pnand %p185, %p186
      %p188 = pneg %p187
      // Predicated region
      $region9: #{tpu_custom_call.1} parent=5 // pred_check
        _
      $region10: #{tpu_custom_call.1} parent=5 // pred_check_branch
        %190 = sbr.rel (%p187) target = $region12
      $region11: #{tpu_custom_call.1} parent=5 // pred_region
        %s191 = ssub.s32 %s19, 1
        // Predicated region
        $region13: #{tpu_custom_call.1} parent=11 // pred_check
          %p192 = pneg %p83
        $region14: #{tpu_custom_call.1} parent=11 // pred_check_branch
          %194 = sbr.rel (%p192) target = $region16
        $region15: #{tpu_custom_call.1} parent=11 // pred_region
          %s196 = ssub.s32 2048, 2048
          %197 = vsyncadd [#allocation8], %s196
          %s198 = smul.addr %s29, 128
          %s199 = scalar_lea.hbm %s1, %s198
          %s200 = sshll.u32 [#allocation7], 4
          %s201 = int_to_ptr.vmem [resolvable:$true] %s200
          %206 = dma.hbm_to_vmem [thread:$0]  %s199, 2048, %s201, [#allocation8], 128, 128, 8
        $region16: #{tpu_custom_call.1} parent=11 // pred_fallthru
          _
        // Predicated region
        $region17: #{tpu_custom_call.1} parent=11 // pred_check
          %p207 = pneg %p109
        $region18: #{tpu_custom_call.1} parent=11 // pred_check_branch
          %209 = sbr.rel (%p207) target = $region20
        $region19: #{tpu_custom_call.1} parent=11 // pred_region
          %s210 = smul.u32 16, %s29
          %s212 = ssub.s32 2048, 2048
          %213 = vsyncadd [#allocation8], %s212
          %s214 = smul.addr %s210, 128
          %s215 = scalar_lea.hbm %s2, %s214
          %s216 = sshll.u32 [#allocation9], 4
          %s217 = int_to_ptr.vmem [resolvable:$true] %s216
          %222 = dma.hbm_to_vmem [thread:$0]  %s215, 2048, %s217, [#allocation8], 128, 128, 8
        $region20: #{tpu_custom_call.1} parent=11 // pred_fallthru
          _
        // Predicated region
        $region21: #{tpu_custom_call.1} parent=11 // pred_check
          %p223 = pneg %p130
        $region22: #{tpu_custom_call.1} parent=11 // pred_check_branch
          %225 = sbr.rel (%p223) target = $region24
        $region23: #{tpu_custom_call.1} parent=11 // pred_region
          _
        $region24: #{tpu_custom_call.1} parent=11 // pred_fallthru
          _
        // Predicated region
        $region25: #{tpu_custom_call.1} parent=11 // pred_check
          %p226 = pneg %p151
        $region26: #{tpu_custom_call.1} parent=11 // pred_check_branch
          %228 = sbr.rel (%p226) target = $region28
        $region27: #{tpu_custom_call.1} parent=11 // pred_region
          _
        $region28: #{tpu_custom_call.1} parent=11 // pred_fallthru
          _
      $region12: #{tpu_custom_call.1} parent=5 // pred_fallthru
        _
      %p229 = scmp.lt.s32.totalorder %s19, 2
      // Predicated region
      $region29: #{tpu_custom_call.1} parent=5 // pred_check
        %p230 = pneg %p229
      $region30: #{tpu_custom_call.1} parent=5 // pred_check_branch
        %232 = sbr.rel (%p230) target = $region32
      $region31: #{tpu_custom_call.1} parent=5 // pred_region
        // Predicated region
        $region33: #{tpu_custom_call.1} parent=31 // pred_check
          %p233 = pneg %p51
        $region34: #{tpu_custom_call.1} parent=31 // pred_check_branch
          %235 = sbr.rel (%p233) target = $region36
        $region35: #{tpu_custom_call.1} parent=31 // pred_region
          %s236 = sand.u32 %s41, 1
          %s237 = scalar_lea.sflag [#allocation5], %s236
          %s238 = sand.u32 %s41, 1
          %s239 = smul.addr %s238, 8
          %s240 = scalar_lea.vmem [#allocation4], %s239
          %s242 = ssub.s32 128, 128
          %243 = vsyncadd %s237, %s242
          %s244 = smul.addr %s26, 128
          %s245 = scalar_lea.hbm %s0, %s244
          %s247 = sshll.u32 %s240, 4
          %s248 = int_to_ptr.vmem [resolvable:$true] %s247
          %250 = dma.hbm_to_vmem [thread:$0]  %s245, 128, %s248, %s237
        $region36: #{tpu_custom_call.1} parent=31 // pred_fallthru
          _
      $region32: #{tpu_custom_call.1} parent=5 // pred_fallthru
        _
      %p251 = scmp.le.s32.totalorder 1, %s19
      %p252 = scmp.lt.s32.totalorder %s19, 3
      %p253 = pnand %p251, %p252
      %p254 = pneg %p253
      // Predicated region
      $region37: #{tpu_custom_call.1} parent=5 // pred_check
        _
      $region38: #{tpu_custom_call.1} parent=5 // pred_check_branch
        %256 = sbr.rel (%p253) target = $region40
      $region39: #{tpu_custom_call.1} parent=5 // pred_region
        %s257 = ssub.s32 %s19, 1
        %s258 = sand.u32 %s44, 1
        %s259 = scalar_lea.sflag [#allocation5], %s258
        %s260 = sand.u32 %s44, 1
        %s261 = smul.addr %s260, 8
        %s262 = scalar_lea.vmem [#allocation4], %s261
        // Predicated region
        $region41: #{tpu_custom_call.1} parent=39 // pred_check
          %p263 = pneg %p57
        $region42: #{tpu_custom_call.1} parent=39 // pred_check_branch
          %265 = sbr.rel (%p263) target = $region44
        $region43: #{tpu_custom_call.1} parent=39 // pred_region
          %266 = dma.done %s259, 128
        $region44: #{tpu_custom_call.1} parent=39 // pred_fallthru
          _
        // Predicated region
        $region45: #{tpu_custom_call.1} parent=39 // pred_check
          %p267 = pneg %p83
        $region46: #{tpu_custom_call.1} parent=39 // pred_check_branch
          %269 = sbr.rel (%p267) target = $region48
        $region47: #{tpu_custom_call.1} parent=39 // pred_region
          %270 = dma.done [#allocation8], 2048
        $region48: #{tpu_custom_call.1} parent=39 // pred_fallthru
          _
        // Predicated region
        $region49: #{tpu_custom_call.1} parent=39 // pred_check
          %p271 = pneg %p109
        $region50: #{tpu_custom_call.1} parent=39 // pred_check_branch
          %273 = sbr.rel (%p271) target = $region52
        $region51: #{tpu_custom_call.1} parent=39 // pred_region
          %274 = dma.done [#allocation8], 2048
        $region52: #{tpu_custom_call.1} parent=39 // pred_fallthru
          _
        %s275 = sand.u32 %s44, 1
        %s276 = scalar_lea.sflag [#allocation5], %s275
        %s277 = sand.u32 %s44, 1
        %s278 = smul.addr %s277, 8
        %s279 = scalar_lea.vmem [#allocation4], %s278
        %p280 = pneg %p57
        %p281 = pneg %p54
        %p282 = pneg %p83
        %p283 = pneg %p80
        %p284 = pneg %p109
        %p285 = pneg %p106
        %p286 = pneg %p130
        %p287 = pneg %p127
        %p288 = pneg %p151
        %p289 = pneg %p148
        %p290 = pneg %p177
        %p291 = pneg %p174
        %s292 = sand.u32 %s164, 1
        %s293 = scalar_lea.sflag [#allocation6], %s292
        %s294 = sand.u32 %s164, 1
        %s295 = smul.addr %s294, 8
        %s296 = scalar_lea.vmem [#allocation10], %s295
        %s297 = smul.u32 16, %s29
        %p298 = scmp.eq.s32.totalorder %s29, 0
        // Predicated region
        $region53: #{tpu_custom_call.1} parent=39 // pred_check
          %p299 = pneg %p298
        $region54: #{tpu_custom_call.1} parent=39 // pred_check_branch
          %301 = sbr.rel (%p299) target = $region56
        $region55: #{tpu_custom_call.1} parent=39 // pred_region
          %302 = vst [vmem:[#allocation2] sm:$0xff] 0.0
        $region56: #{tpu_custom_call.1} parent=39 // pred_fallthru
          _
        %v303 = vld [vmem:[%s262] sm:$0xff]
        %v304 = vld [vmem:[#allocation7] sm:$0xff]
        %v305 = vld [vmem:[#allocation7 + $0x8] sm:$0xff]
        %v306 = vld [vmem:[#allocation7 + $0x10] sm:$0xff]
        %v307 = vld [vmem:[#allocation7 + $0x18] sm:$0xff]
        %v308 = vld [vmem:[#allocation7 + $0x20] sm:$0xff]
        %v309 = vld [vmem:[#allocation7 + $0x28] sm:$0xff]
        %v310 = vld [vmem:[#allocation7 + $0x30] sm:$0xff]
        %v311 = vld [vmem:[#allocation7 + $0x38] sm:$0xff]
        %v312 = vld [vmem:[#allocation7 + $0x40] sm:$0xff]
        %v313 = vld [vmem:[#allocation7 + $0x48] sm:$0xff]
        %v314 = vld [vmem:[#allocation7 + $0x50] sm:$0xff]
        %v315 = vld [vmem:[#allocation7 + $0x58] sm:$0xff]
        %v316 = vld [vmem:[#allocation7 + $0x60] sm:$0xff]
        %v317 = vld [vmem:[#allocation7 + $0x68] sm:$0xff]
        %v318 = vld [vmem:[#allocation7 + $0x70] sm:$0xff]
        %v319 = vld [vmem:[#allocation7 + $0x78] sm:$0xff]
        %320 = vmatprep.subr.mxu0 0.0
        %321 = vmatpush1.msra.mxu0 %v319
        %322 = vmatprep.subr.mxu0 0.0
        %323 = vmatpush1.msra.mxu0 %v318
        %324 = vmatprep.subr.mxu0 0.0
        %325 = vmatpush1.msra.mxu0 %v317
        %326 = vmatprep.subr.mxu0 0.0
        %327 = vmatpush1.msra.mxu0 %v316
        %328 = vmatprep.subr.mxu0 0.0
        %329 = vmatpush1.msra.mxu0 %v315
        %330 = vmatprep.subr.mxu0 0.0
        %331 = vmatpush1.msra.mxu0 %v314
        %332 = vmatprep.subr.mxu0 0.0
        %333 = vmatpush1.msra.mxu0 %v313
        %334 = vmatprep.subr.mxu0 0.0
        %335 = vmatpush1.msra.mxu0 %v312
        %336 = vmatprep.subr.mxu0 0.0
        %337 = vmatpush1.msra.mxu0 %v311
        %338 = vmatprep.subr.mxu0 0.0
        %339 = vmatpush1.msra.mxu0 %v310
        %340 = vmatprep.subr.mxu0 0.0
        %341 = vmatpush1.msra.mxu0 %v309
        %342 = vmatprep.subr.mxu0 0.0
        %343 = vmatpush1.msra.mxu0 %v308
        %344 = vmatprep.subr.mxu0 0.0
        %345 = vmatpush1.msra.mxu0 %v307
        %346 = vmatprep.subr.mxu0 0.0
        %347 = vmatpush1.msra.mxu0 %v306
        %348 = vmatprep.subr.mxu0 0.0
        %349 = vmatpush1.msra.mxu0 %v305
        %350 = vmatprep.subr.mxu0 0.0
        %351 = vmatpush1.msra.mxu0 %v304
        %352 = vmatprep.subr.mxu0 0.0
        %353 = vmatpush2.msra.mxu0 0.0
        %354 = vmatprep.subr.mxu0 0.0
        %355 = vmatpush2.msra.mxu0 0.0
        %356 = vmatprep.subr.mxu0 0.0
        %357 = vmatpush2.msra.mxu0 0.0
        %358 = vmatprep.subr.mxu0 0.0
        %359 = vmatpush2.msra.mxu0 0.0
        %360 = vmatprep.subr.mxu0 0.0
        %361 = vmatpush2.msra.mxu0 0.0
        %362 = vmatprep.subr.mxu0 0.0
        %363 = vmatpush2.msra.mxu0 0.0
        %364 = vmatprep.subr.mxu0 0.0
        %365 = vmatpush2.msra.mxu0 0.0
        %366 = vmatprep.subr.mxu0 0.0
        %367 = vmatpush2.msra.mxu0 0.0
        %368 = vmatprep.subr.mxu0 0.0
        %369 = vmatpush2.msra.mxu0 0.0
        %370 = vmatprep.subr.mxu0 0.0
        %371 = vmatpush2.msra.mxu0 0.0
        %372 = vmatprep.subr.mxu0 0.0
        %373 = vmatpush2.msra.mxu0 0.0
        %374 = vmatprep.subr.mxu0 0.0
        %375 = vmatpush2.msra.mxu0 0.0
        %376 = vmatprep.subr.mxu0 0.0
        %377 = vmatpush2.msra.mxu0 0.0
        %378 = vmatprep.subr.mxu0 0.0
        %379 = vmatpush2.msra.mxu0 0.0
        %380 = vmatprep.subr.mxu0 0.0
        %381 = vmatpush2.msra.mxu0 0.0
        %382 = vmatprep.subr.mxu0 0.0
        %383 = vmatpush2.msra.mxu0 0.0
        %384 = vmatprep.mubr.f32.mxu0 0.0
        %385 = vmatmul.mubr.f32.gmra.mxu0 %v303
        %v386 = vpop.f32.mrf.mxu0
        %v387 = vadd.f32 0.0, %v386
        %v388 = vpop.f32.mrf.mxu0
        %389 = vdwg.mxu0
        %v390 = vmax.f32 %v387, 0.0
        %v391 = vld [vmem:[#allocation2] sm:$0xff]
        %v392 = vmul.f32 %v390, %v390
        %v393 = vld [vmem:[#allocation9] sm:$0xff]
        %v394 = vld [vmem:[#allocation9 + $0x8] sm:$0xff]
        %v395 = vld [vmem:[#allocation9 + $0x10] sm:$0xff]
        %v396 = vld [vmem:[#allocation9 + $0x18] sm:$0xff]
        %v397 = vld [vmem:[#allocation9 + $0x20] sm:$0xff]
        %v398 = vld [vmem:[#allocation9 + $0x28] sm:$0xff]
        %v399 = vld [vmem:[#allocation9 + $0x30] sm:$0xff]
        %v400 = vld [vmem:[#allocation9 + $0x38] sm:$0xff]
        %v401 = vld [vmem:[#allocation9 + $0x40] sm:$0xff]
        %v402 = vld [vmem:[#allocation9 + $0x48] sm:$0xff]
        %v403 = vld [vmem:[#allocation9 + $0x50] sm:$0xff]
        %v404 = vld [vmem:[#allocation9 + $0x58] sm:$0xff]
        %v405 = vld [vmem:[#allocation9 + $0x60] sm:$0xff]
        %v406 = vld [vmem:[#allocation9 + $0x68] sm:$0xff]
        %v407 = vld [vmem:[#allocation9 + $0x70] sm:$0xff]
        %v408 = vld [vmem:[#allocation9 + $0x78] sm:$0xff]
        %409 = vmatprep.subr.mxu0 0.0
        %410 = vmatpush1.msra.mxu0 %v408
        %411 = vmatprep.subr.mxu0 0.0
        %412 = vmatpush1.msra.mxu0 %v407
        %413 = vmatprep.subr.mxu0 0.0
        %414 = vmatpush1.msra.mxu0 %v406
        %415 = vmatprep.subr.mxu0 0.0
        %416 = vmatpush1.msra.mxu0 %v405
        %417 = vmatprep.subr.mxu0 0.0
        %418 = vmatpush1.msra.mxu0 %v404
        %419 = vmatprep.subr.mxu0 0.0
        %420 = vmatpush1.msra.mxu0 %v403
        %421 = vmatprep.subr.mxu0 0.0
        %422 = vmatpush1.msra.mxu0 %v402
        %423 = vmatprep.subr.mxu0 0.0
        %424 = vmatpush1.msra.mxu0 %v401
        %425 = vmatprep.subr.mxu0 0.0
        %426 = vmatpush1.msra.mxu0 %v400
        %427 = vmatprep.subr.mxu0 0.0
        %428 = vmatpush1.msra.mxu0 %v399
        %429 = vmatprep.subr.mxu0 0.0
        %430 = vmatpush1.msra.mxu0 %v398
        %431 = vmatprep.subr.mxu0 0.0
        %432 = vmatpush1.msra.mxu0 %v397
        %433 = vmatprep.subr.mxu0 0.0
        %434 = vmatpush1.msra.mxu0 %v396
        %435 = vmatprep.subr.mxu0 0.0
        %436 = vmatpush1.msra.mxu0 %v395
        %437 = vmatprep.subr.mxu0 0.0
        %438 = vmatpush1.msra.mxu0 %v394
        %439 = vmatprep.subr.mxu0 0.0
        %440 = vmatpush1.msra.mxu0 %v393
        %441 = vmatprep.subr.mxu0 0.0
        %442 = vmatpush2.msra.mxu0 0.0
        %443 = vmatprep.subr.mxu0 0.0
        %444 = vmatpush2.msra.mxu0 0.0
        %445 = vmatprep.subr.mxu0 0.0
        %446 = vmatpush2.msra.mxu0 0.0
        %447 = vmatprep.subr.mxu0 0.0
        %448 = vmatpush2.msra.mxu0 0.0
        %449 = vmatprep.subr.mxu0 0.0
        %450 = vmatpush2.msra.mxu0 0.0
        %451 = vmatprep.subr.mxu0 0.0
        %452 = vmatpush2.msra.mxu0 0.0
        %453 = vmatprep.subr.mxu0 0.0
        %454 = vmatpush2.msra.mxu0 0.0
        %455 = vmatprep.subr.mxu0 0.0
        %456 = vmatpush2.msra.mxu0 0.0
        %457 = vmatprep.subr.mxu0 0.0
        %458 = vmatpush2.msra.mxu0 0.0
        %459 = vmatprep.subr.mxu0 0.0
        %460 = vmatpush2.msra.mxu0 0.0
        %461 = vmatprep.subr.mxu0 0.0
        %462 = vmatpush2.msra.mxu0 0.0
        %463 = vmatprep.subr.mxu0 0.0
        %464 = vmatpush2.msra.mxu0 0.0
        %465 = vmatprep.subr.mxu0 0.0
        %466 = vmatpush2.msra.mxu0 0.0
        %467 = vmatprep.subr.mxu0 0.0
        %468 = vmatpush2.msra.mxu0 0.0
        %469 = vmatprep.subr.mxu0 0.0
        %470 = vmatpush2.msra.mxu0 0.0
        %471 = vmatprep.subr.mxu0 0.0
        %472 = vmatpush2.msra.mxu0 0.0
        %473 = vmatprep.mubr.f32.mxu0 0.0
        %474 = vmatmul.mubr.f32.gmra.mxu0 %v392
        %v475 = vpop.f32.mrf.mxu0
        %v476 = vadd.f32 0.0, %v475
        %v477 = vpop.f32.mrf.mxu0
        %478 = vdwg.mxu0
        %v479 = vadd.f32 %v391, %v476
        %480 = vst [vmem:[#allocation2] sm:$0xff] %v479
        // Predicated region
        $region57: #{tpu_custom_call.1} parent=39 // pred_check
          %p481 = pneg %p298
        $region58: #{tpu_custom_call.1} parent=39 // pred_check_branch
          %483 = sbr.rel (%p481) target = $region60
        $region59: #{tpu_custom_call.1} parent=39 // pred_region
          %s484 = sld [smem:[#allocation3]]
          %v485 = vld [vmem:[#allocation2] sm:$0xff]
          %v486 = vstv %s484
          %v487 = vmul.f32 %v486, %v485
          %v488 = vld [vmem:[%s4] sm:$0x1]
          %v490 = vlaneseq
          %v491 = vshrl.u32 %v490, 7
          %v492 = vsub.s32 0, %v491
          %v493 = vrot.slane %v488, %v492
          %v495 = vadd.f32 %v487, %v493
          %496 = vst [vmem:[%s296] sm:$0xff] %v495
        $region60: #{tpu_custom_call.1} parent=39 // pred_fallthru
          _
        %s497 = sand.u32 %s164, 1
        %s498 = scalar_lea.sflag [#allocation6], %s497
        %s499 = sand.u32 %s164, 1
        %s500 = smul.addr %s499, 8
        %s501 = scalar_lea.vmem [#allocation10], %s500
        // Predicated region
        $region61: #{tpu_custom_call.1} parent=39 // pred_check
          %p502 = pneg %p174
        $region62: #{tpu_custom_call.1} parent=39 // pred_check_branch
          %504 = sbr.rel (%p502) target = $region64
        $region63: #{tpu_custom_call.1} parent=39 // pred_region
          %s506 = ssub.s32 128, 128
          %507 = vsyncadd %s498, %s506
          %s508 = smul.addr %s28, 128
          %s509 = scalar_lea.hbm %s5, %s508
          %s511 = sshll.u32 %s501, 4
          %s512 = int_to_ptr.vmem [resolvable:$true] %s511
          %514 = dma.vmem_to_hbm [thread:$0]  %s512, 128, %s509, %s498
        $region64: #{tpu_custom_call.1} parent=39 // pred_fallthru
          _
      $region40: #{tpu_custom_call.1} parent=5 // pred_fallthru
        _
      %p515 = scmp.le.s32.totalorder 2, %s19
      // Predicated region
      $region65: #{tpu_custom_call.1} parent=5 // pred_check
        %p516 = pneg %p515
      $region66: #{tpu_custom_call.1} parent=5 // pred_check_branch
        %518 = sbr.rel (%p516) target = $region68
      $region67: #{tpu_custom_call.1} parent=5 // pred_region
        %s519 = ssub.s32 %s19, 2
        // Predicated region
        $region69: #{tpu_custom_call.1} parent=67 // pred_check
          %p520 = pneg %p180
        $region70: #{tpu_custom_call.1} parent=67 // pred_check_branch
          %522 = sbr.rel (%p520) target = $region72
        $region71: #{tpu_custom_call.1} parent=67 // pred_region
          %s523 = sand.u32 %s165, 1
          %s524 = scalar_lea.sflag [#allocation6], %s523
          %s525 = sand.u32 %s165, 1
          %s526 = smul.addr %s525, 8
          %s527 = scalar_lea.vmem [#allocation10], %s526
          %528 = dma.done %s524, 128
        $region72: #{tpu_custom_call.1} parent=67 // pred_fallthru
          _
      $region68: #{tpu_custom_call.1} parent=5 // pred_fallthru
        _
    $region6: #{tpu_custom_call.1} parent=1 // loop_footer
      %s23 = sadd.s32 1, %s19
    $region7: #{tpu_custom_call.1} parent=1 // loop_footer_branch
      %18 = sbr.rel target = $region3
    $region8: #{tpu_custom_call.1} parent=1 // loop_exit
      _
    %529 = vsyncpa [#allocation5], 1
    %s530 = scalar_lea.sflag [#allocation5], 1
    %531 = vsyncpa %s530, 1
    %532 = vsyncpa [#allocation8], 1
    %533 = vsyncpa [#allocation6], 1
    %s534 = scalar_lea.sflag [#allocation6], 1
    %535 = vsyncpa %s534, 1

</llo_original>
